<compile_context>
chip_gen: v7x
topology: tpu7x:2x2x1
jax: 0.10.0
libtpu: 0.0.40
codegen_flags: <defaults>
</compile_context>

<pallas_src>
import jax
import jax.numpy as jnp
from jax.experimental import pallas as pl
from jax.experimental.pallas import tpu as pltpu


def _round_up(v, m):
    return ((v + m - 1) // m) * m


# ---------------------------------------------------------------------------
# Kernels (one grid step = one batch tile; weights are VMEM-resident)
# ---------------------------------------------------------------------------
def _mlp_kernel_with_acts(x_ref, w1_ref, b1_ref, w2_ref, b2_ref, w3_ref,
                          b3_ref, out_ref, a1_ref, a2_ref):
    x = x_ref[...]                                           # bf16 (bn, in_p)

    h1 = jnp.dot(x, w1_ref[...], preferred_element_type=jnp.float32)
    a1 = jnp.maximum(h1 + b1_ref[...], 0.0)                  # f32
    a1_ref[...] = a1

    h2 = jnp.dot(a1.astype(jnp.bfloat16), w2_ref[...],
                 preferred_element_type=jnp.float32)
    a2 = jnp.maximum(h2 + b2_ref[...], 0.0)
    a2_ref[...] = a2

    h3 = jnp.dot(a2.astype(jnp.bfloat16), w3_ref[...],
                 preferred_element_type=jnp.float32)
    out_ref[...] = h3 + b3_ref[...]


def _mlp_kernel_fwd_only(x_ref, w1_ref, b1_ref, w2_ref, b2_ref, w3_ref,
                         b3_ref, out_ref):
    x = x_ref[...]
    a1 = jnp.maximum(
        jnp.dot(x, w1_ref[...], preferred_element_type=jnp.float32)
        + b1_ref[...], 0.0)
    a2 = jnp.maximum(
        jnp.dot(a1.astype(jnp.bfloat16), w2_ref[...],
                preferred_element_type=jnp.float32) + b2_ref[...], 0.0)
    out_ref[...] = (
        jnp.dot(a2.astype(jnp.bfloat16), w3_ref[...],
                preferred_element_type=jnp.float32) + b3_ref[...])


# ---------------------------------------------------------------------------
# Parameter packing: lane-dense (128-multiple) feature dims, bf16 weights
# ---------------------------------------------------------------------------
def pack_params(params):
    """Pad all feature dims to multiples of 128 and cast weights to bf16.

    Biases stay f32.  Zero padding is exact for matmul + ReLU, so the padded
    computation matches the unpadded one on the logical slice.
    Returns (packed_params, logical_dims).
    """
    w1, b1, w2, b2, w3, b3 = params
    dims = (w1.shape[0], w1.shape[1], w2.shape[1], w3.shape[1])
    in_p, h1_p, h2_p, nc_p = (_round_up(d, 128) for d in dims)

    def pad2(a, rows, cols):
        return jnp.pad(a, ((0, rows - a.shape[0]), (0, cols - a.shape[1])))

    packed = (
        pad2(w1, in_p, h1_p).astype(jnp.bfloat16),
        pad2(b1, 1, h1_p).astype(jnp.float32),
        pad2(w2, h1_p, h2_p).astype(jnp.bfloat16),
        pad2(b2, 1, h2_p).astype(jnp.float32),
        pad2(w3, h2_p, nc_p).astype(jnp.bfloat16),
        pad2(b3, 1, nc_p).astype(jnp.float32),
    )
    return packed, dims


# ---------------------------------------------------------------------------
# Forward wrapper
# ---------------------------------------------------------------------------
def sparse_mlp_forward(x, packed_params, dims, *, block_n=128,
                       return_activations=True):
    """x: (N, C, H, W) f32.  Returns (out, [a1, a2]) like the torch module,
    or just `out` when return_activations=False (inference path)."""
    w1, b1, w2, b2, w3, b3 = packed_params
    in_size, h1, h2, nc = dims
    in_p, h1_p = w1.shape
    h2_p = w2.shape[1]
    nc_p = w3.shape[1]

    n = x.shape[0]
    x2d = x.reshape(n, -1)                      # torch: x.view(x.size(0), -1)
    assert x2d.shape[1] == in_size

    # Pad features to the lane-dense width, pad batch to the tile size, and
    # stream the input in bf16 (accumulation stays f32 inside the kernel).
    bn = min(block_n, _round_up(max(n, 1), 8))
    n_pad = _round_up(n, bn)
    x2d = jnp.pad(x2d, ((0, n_pad - n), (0, in_p - in_size))).astype(jnp.bfloat16)

    grid = (n_pad // bn,)
    stream = lambda cols: pl.BlockSpec((bn, cols), lambda i: (i, 0))
    resident = lambda shape: pl.BlockSpec(shape, lambda i: (0, 0))

    in_specs = [
        stream(in_p),                                   # x: streams per tile
        resident((in_p, h1_p)), resident((1, h1_p)),    # weights/biases stay
        resident((h1_p, h2_p)), resident((1, h2_p)),    # VMEM-resident across
        resident((h2_p, nc_p)), resident((1, nc_p)),    # batch tiles
    ]
    compiler_params = pltpu.CompilerParams(
        dimension_semantics=("parallel",),      # batch tiles shard on v7x TCs
        vmem_limit_bytes=32 * 1024 * 1024,      # sized for v7x scoped VMEM
    )

    if return_activations:
        out_p, a1_p, a2_p = pl.pallas_call(
            _mlp_kernel_with_acts,
            out_shape=(
                jax.ShapeDtypeStruct((n_pad, nc_p), jnp.float32),
                jax.ShapeDtypeStruct((n_pad, h1_p), jnp.float32),
                jax.ShapeDtypeStruct((n_pad, h2_p), jnp.float32),
            ),
            grid=grid,
            in_specs=in_specs,
            out_specs=(stream(nc_p), stream(h1_p), stream(h2_p)),
            compiler_params=compiler_params,
        )(x2d, w1, b1, w2, b2, w3, b3)
        return out_p[:n, :nc], [a1_p[:n, :h1], a2_p[:n, :h2]]

    out_p = pl.pallas_call(
        _mlp_kernel_fwd_only,
        out_shape=jax.ShapeDtypeStruct((n_pad, nc_p), jnp.float32),
        grid=grid,
        in_specs=in_specs,
        out_specs=stream(nc_p),
        compiler_params=compiler_params,
    )(x2d, w1, b1, w2, b2, w3, b3)
    return out_p[:n, :nc]


def init_params(key, input_size, hidden_sizes, num_classes):
    """nn.Linear-style uniform(-1/sqrt(fan_in), 1/sqrt(fan_in)) init.

    Weights are stored as (in_features, out_features) -- transposed from the
    PyTorch (out, in) layout -- so the kernel computes x @ W + b."""
    sizes = [input_size, hidden_sizes[0], hidden_sizes[1], num_classes]
    params = []
    for i in range(3):
        fan_in, fan_out = sizes[i], sizes[i + 1]
        key, kw, kb = jax.random.split(key, 3)
        bound = 1.0 / jnp.sqrt(jnp.float32(fan_in))
        w = jax.random.uniform(kw, (fan_in, fan_out), jnp.float32, -bound, bound)
        b = jax.random.uniform(kb, (1, fan_out), jnp.float32, -bound, bound)
        params += [w, b]
    return tuple(params)


if __name__ == "__main__":
    # Small shapes consistent with an image-classification MLP.
    N, C, H, W = 2, 4, 16, 16
    input_size = C * H * W          # 1024
    hidden_sizes = [128, 64]
    num_classes = 10

    key = jax.random.PRNGKey(0)
    key, kx = jax.random.split(key)
    x = jax.random.normal(kx, (N, C, H, W), jnp.float32)

    params = init_params(key, input_size, hidden_sizes, num_classes)
    packed, dims = pack_params(params)

    out, (a1, a2) = sparse_mlp_forward(x, packed, dims)
    out_only = sparse_mlp_forward(x, packed, dims, return_activations=False)
    jax.block_until_ready((out, a1, a2, out_only))

    # Reference with the same bf16-input / f32-accumulate numerics.
    w1, b1, w2, b2, w3, b3 = params
    x2d = x.reshape(N, -1).astype(jnp.bfloat16)
    h1 = jnp.dot(x2d, w1.astype(jnp.bfloat16),
                 preferred_element_type=jnp.float32) + b1
    a1_ref = jnp.maximum(h1, 0.0)
    h2 = jnp.dot(a1_ref.astype(jnp.bfloat16), w2.astype(jnp.bfloat16),
                 preferred_element_type=jnp.float32) + b2
    a2_ref = jnp.maximum(h2, 0.0)
    out_ref = jnp.dot(a2_ref.astype(jnp.bfloat16), w3.astype(jnp.bfloat16),
                      preferred_element_type=jnp.float32) + b3

    assert jnp.allclose(a1, a1_ref, atol=1e-2, rtol=1e-2), "a1 mismatch"
    assert jnp.allclose(a2, a2_ref, atol=1e-2, rtol=1e-2), "a2 mismatch"
    assert jnp.allclose(out, out_ref, atol=1e-2, rtol=1e-2), "out mismatch"
    assert jnp.allclose(out_only, out, atol=1e-5), "fwd-only mismatch"

    print("KERNEL_OK")
</pallas_src>

<mosaic_0001>
module attributes {stable_mosaic.version = 11 : i64} {
  func.func @_mlp_kernel_with_acts(%arg0: i32, %arg1: memref<8x1024xbf16, #tpu.memory_space<vmem>>, %arg2: memref<1024x128xbf16, #tpu.memory_space<vmem>>, %arg3: memref<1x128xf32, #tpu.memory_space<vmem>>, %arg4: memref<128x128xbf16, #tpu.memory_space<vmem>>, %arg5: memref<1x128xf32, #tpu.memory_space<vmem>>, %arg6: memref<128x128xbf16, #tpu.memory_space<vmem>>, %arg7: memref<1x128xf32, #tpu.memory_space<vmem>>, %arg8: memref<8x128xf32, #tpu.memory_space<vmem>>, %arg9: memref<8x128xf32, #tpu.memory_space<vmem>>, %arg10: memref<8x128xf32, #tpu.memory_space<vmem>>) attributes {dimension_semantics = [#tpu.dimension_semantics<parallel>], iteration_bounds = array<i64: 1>, scalar_prefetch = 0 : i64, scratch_operands = 0 : i64, tpu.core_type = #tpu.core_type<tc>, window_params = [{transform_indices = @transform_0, window_bounds = array<i64: 8, 1024>}, {pipeline_mode = #tpu.pipeline_mode<synchronous>, transform_indices = @transform_1, window_bounds = array<i64: 1024, 128>}, {pipeline_mode = #tpu.pipeline_mode<synchronous>, transform_indices = @transform_2, window_bounds = array<i64: 1, 128>}, {pipeline_mode = #tpu.pipeline_mode<synchronous>, transform_indices = @transform_3, window_bounds = array<i64: 128, 128>}, {pipeline_mode = #tpu.pipeline_mode<synchronous>, transform_indices = @transform_4, window_bounds = array<i64: 1, 128>}, {pipeline_mode = #tpu.pipeline_mode<synchronous>, transform_indices = @transform_5, window_bounds = array<i64: 128, 128>}, {pipeline_mode = #tpu.pipeline_mode<synchronous>, transform_indices = @transform_6, window_bounds = array<i64: 1, 128>}, {transform_indices = @transform_7, window_bounds = array<i64: 8, 128>}, {transform_indices = @transform_8, window_bounds = array<i64: 8, 128>}, {transform_indices = @transform_9, window_bounds = array<i64: 8, 128>}]} {
    %c0 = arith.constant 0 : index
    %c0_0 = arith.constant 0 : index
    %0 = vector.load %arg1[%c0, %c0_0] : memref<8x1024xbf16, #tpu.memory_space<vmem>>, vector<8x1024xbf16>
    %c0_1 = arith.constant 0 : index
    %c0_2 = arith.constant 0 : index
    %1 = vector.load %arg2[%c0_1, %c0_2] : memref<1024x128xbf16, #tpu.memory_space<vmem>>, vector<1024x128xbf16>
    %cst = arith.constant dense<0.000000e+00> : vector<8x128xf32>
    %2 = tpu.matmul %0, %1, %cst {dimension_numbers = #tpu.dot_dimension_numbers<[1], [0], [0], [1], [0, 0, 1, 1], [], []>} : vector<8x1024xbf16>, vector<1024x128xbf16>, vector<8x128xf32> -> vector<8x128xf32>
    %c0_3 = arith.constant 0 : index
    %c0_4 = arith.constant 0 : index
    %3 = vector.load %arg3[%c0_3, %c0_4] : memref<1x128xf32, #tpu.memory_space<vmem>>, vector<1x128xf32>
    %4 = vector.broadcast %3 : vector<1x128xf32> to vector<8x128xf32>
    %5 = arith.addf %2, %4 : vector<8x128xf32>
    %cst_5 = arith.constant 0.000000e+00 : f32
    %6 = vector.broadcast %cst_5 : f32 to vector<8x128xf32>
    %7 = arith.maximumf %5, %6 : vector<8x128xf32>
    %c0_6 = arith.constant 0 : index
    %c0_7 = arith.constant 0 : index
    %8 = vector.load %arg9[%c0_6, %c0_7] : memref<8x128xf32, #tpu.memory_space<vmem>>, vector<8x128xf32>
    tpu.vector_store %arg9[%c0_6, %c0_7], %7 {strides = array<i32>} : memref<8x128xf32, #tpu.memory_space<vmem>>, vector<8x128xf32>,
    %9 = arith.truncf %7 : vector<8x128xf32> to vector<8x128xbf16>
    %c0_8 = arith.constant 0 : index
    %c0_9 = arith.constant 0 : index
    %10 = vector.load %arg4[%c0_8, %c0_9] : memref<128x128xbf16, #tpu.memory_space<vmem>>, vector<128x128xbf16>
    %cst_10 = arith.constant dense<0.000000e+00> : vector<8x128xf32>
    %11 = tpu.matmul %9, %10, %cst_10 {dimension_numbers = #tpu.dot_dimension_numbers<[1], [0], [0], [1], [0, 0, 1, 1], [], []>} : vector<8x128xbf16>, vector<128x128xbf16>, vector<8x128xf32> -> vector<8x128xf32>
    %c0_11 = arith.constant 0 : index
    %c0_12 = arith.constant 0 : index
    %12 = vector.load %arg5[%c0_11, %c0_12] : memref<1x128xf32, #tpu.memory_space<vmem>>, vector<1x128xf32>
    %13 = vector.broadcast %12 : vector<1x128xf32> to vector<8x128xf32>
    %14 = arith.addf %11, %13 : vector<8x128xf32>
    %cst_13 = arith.constant 0.000000e+00 : f32
    %15 = vector.broadcast %cst_13 : f32 to vector<8x128xf32>
    %16 = arith.maximumf %14, %15 : vector<8x128xf32>
    %c0_14 = arith.constant 0 : index
    %c0_15 = arith.constant 0 : index
    %17 = vector.load %arg10[%c0_14, %c0_15] : memref<8x128xf32, #tpu.memory_space<vmem>>, vector<8x128xf32>
    tpu.vector_store %arg10[%c0_14, %c0_15], %16 {strides = array<i32>} : memref<8x128xf32, #tpu.memory_space<vmem>>, vector<8x128xf32>,
    %18 = arith.truncf %16 : vector<8x128xf32> to vector<8x128xbf16>
    %c0_16 = arith.constant 0 : index
    %c0_17 = arith.constant 0 : index
    %19 = vector.load %arg6[%c0_16, %c0_17] : memref<128x128xbf16, #tpu.memory_space<vmem>>, vector<128x128xbf16>
    %cst_18 = arith.constant dense<0.000000e+00> : vector<8x128xf32>
    %20 = tpu.matmul %18, %19, %cst_18 {dimension_numbers = #tpu.dot_dimension_numbers<[1], [0], [0], [1], [0, 0, 1, 1], [], []>} : vector<8x128xbf16>, vector<128x128xbf16>, vector<8x128xf32> -> vector<8x128xf32>
    %c0_19 = arith.constant 0 : index
    %c0_20 = arith.constant 0 : index
    %21 = vector.load %arg7[%c0_19, %c0_20] : memref<1x128xf32, #tpu.memory_space<vmem>>, vector<1x128xf32>
    %22 = vector.broadcast %21 : vector<1x128xf32> to vector<8x128xf32>
    %23 = arith.addf %20, %22 : vector<8x128xf32>
    %c0_21 = arith.constant 0 : index
    %c0_22 = arith.constant 0 : index
    %24 = vector.load %arg8[%c0_21, %c0_22] : memref<8x128xf32, #tpu.memory_space<vmem>>, vector<8x128xf32>
    tpu.vector_store %arg8[%c0_21, %c0_22], %23 {strides = array<i32>} : memref<8x128xf32, #tpu.memory_space<vmem>>, vector<8x128xf32>,
    return
  }
  func.func @transform_0(%arg0: i32) -> (i32, i32) {
    %c0_i32 = arith.constant 0 : i32
    %c0_i32_0 = arith.constant 0 : i32
    return %arg0, %c0_i32 : i32, i32
  }
  func.func @transform_1(%arg0: i32) -> (i32, i32) {
    %c0_i32 = arith.constant 0 : i32
    %c0_i32_0 = arith.constant 0 : i32
    %c0_i32_1 = arith.constant 0 : i32
    return %c0_i32, %c0_i32_0 : i32, i32
  }
  func.func @transform_2(%arg0: i32) -> (i32, i32) {
    %c0_i32 = arith.constant 0 : i32
    %c0_i32_0 = arith.constant 0 : i32
    %c0_i32_1 = arith.constant 0 : i32
    return %c0_i32, %c0_i32_0 : i32, i32
  }
  func.func @transform_3(%arg0: i32) -> (i32, i32) {
    %c0_i32 = arith.constant 0 : i32
    %c0_i32_0 = arith.constant 0 : i32
    %c0_i32_1 = arith.constant 0 : i32
    return %c0_i32, %c0_i32_0 : i32, i32
  }
  func.func @transform_4(%arg0: i32) -> (i32, i32) {
    %c0_i32 = arith.constant 0 : i32
    %c0_i32_0 = arith.constant 0 : i32
    %c0_i32_1 = arith.constant 0 : i32
    return %c0_i32, %c0_i32_0 : i32, i32
  }
  func.func @transform_5(%arg0: i32) -> (i32, i32) {
    %c0_i32 = arith.constant 0 : i32
    %c0_i32_0 = arith.constant 0 : i32
    %c0_i32_1 = arith.constant 0 : i32
    return %c0_i32, %c0_i32_0 : i32, i32
  }
  func.func @transform_6(%arg0: i32) -> (i32, i32) {
    %c0_i32 = arith.constant 0 : i32
    %c0_i32_0 = arith.constant 0 : i32
    %c0_i32_1 = arith.constant 0 : i32
    return %c0_i32, %c0_i32_0 : i32, i32
  }
  func.func @transform_7(%arg0: i32) -> (i32, i32) {
    %c0_i32 = arith.constant 0 : i32
    %c0_i32_0 = arith.constant 0 : i32
    return %arg0, %c0_i32 : i32, i32
  }
  func.func @transform_8(%arg0: i32) -> (i32, i32) {
    %c0_i32 = arith.constant 0 : i32
    %c0_i32_0 = arith.constant 0 : i32
    return %arg0, %c0_i32 : i32, i32
  }
  func.func @transform_9(%arg0: i32) -> (i32, i32) {
    %c0_i32 = arith.constant 0 : i32
    %c0_i32_0 = arith.constant 0 : i32
    return %arg0, %c0_i32 : i32, i32
  }
}

</mosaic_0001>

<llo_original>
// kernel: tpu_custom_call.1
$region0: #{tpu_custom_call.1}
  #allocation0 [shape = 'u32[]', space=smem, size = 0x4, offset = 0x4, fixed_abs, tag = 'smem constant byte address 0x4 - core index']
  #allocation1 [shape = 'u32[144,128]{1,0:T(1,128)}', space=vmem, size = 0x12000, scoped, tag = 'internal scratch']
  %s0 = inlined_call_operand.hbm [shape: bf16[8,1024], index: 0, kind: input, shape index: {}]
  %s1 = inlined_call_operand.hbm [shape: bf16[1024,128], index: 1, kind: input, shape index: {}]
  %s2 = inlined_call_operand.vmem [shape: f32[1,128], index: 2, kind: input, shape index: {}]
  %s3 = inlined_call_operand.hbm [shape: bf16[128,128], index: 3, kind: input, shape index: {}]
  %s4 = inlined_call_operand.vmem [shape: f32[1,128], index: 4, kind: input, shape index: {}]
  %s5 = inlined_call_operand.hbm [shape: bf16[128,128], index: 5, kind: input, shape index: {}]
  %s6 = inlined_call_operand.vmem [shape: f32[1,128], index: 6, kind: input, shape index: {}]
  %s7 = inlined_call_operand.hbm [shape: f32[8,128], index: 7, kind: output, shape index: {0}]
  %s8 = inlined_call_operand.hbm [shape: f32[8,128], index: 8, kind: output, shape index: {1}]
  %s9 = inlined_call_operand.hbm [shape: f32[8,128], index: 9, kind: output, shape index: {2}]
  %10 = xla_tuple %s7, %s8, %s9
  %s11 = sld [smem:[#allocation0]]
  $region70: #{tpu_custom_call.1} parent=0
    _
  %s13 = ssub.s32 1, %s11
  %s14 = scalar_select 0, %s13, %s11
  $region1: #{tpu_custom_call.1} parent=0
    #allocation2 [shape = 'u8[16384]{0}', space=vmem, size = 0x4000, scoped, tag = 'input window, operand 0, single buffered']
    #allocation3 [shape = 's32[1]{0}', space=sflag, size = 0x4, scoped, tag = 'scoped memory for tpu_custom_call.1']
    #allocation4 [shape = 's32[1]{0}', space=sflag, size = 0x4, scoped, tag = 'scoped memory for tpu_custom_call.1']
    #allocation5 [shape = 'u8[262144]{0}', space=vmem, size = 0x40000, scoped, tag = 'input window, operand 1, single buffered']
    #allocation6 [shape = 's32[1]{0}', space=sflag, size = 0x4, scoped, tag = 'scoped memory for tpu_custom_call.1']
    #allocation7 [shape = 'u8[32768]{0}', space=vmem, size = 0x8000, scoped, tag = 'input window, operand 3, single buffered']
    #allocation8 [shape = 'u8[32768]{0}', space=vmem, size = 0x8000, scoped, tag = 'input window, operand 5, single buffered']
    #allocation9 [shape = 's32[1]{0}', space=sflag, size = 0x4, scoped, tag = 'scoped memory for tpu_custom_call.1']
    #allocation10 [shape = 'u8[4096]{0}', space=vmem, size = 0x1000, scoped, tag = 'output window, operand 0, single buffered']
    #allocation11 [shape = 'u8[4096]{0}', space=vmem, size = 0x1000, scoped, tag = 'output window, operand 1, single buffered']
    #allocation12 [shape = 's32[1]{0}', space=sflag, size = 0x4, scoped, tag = 'scoped memory for tpu_custom_call.1']
    #allocation13 [shape = 'u8[4096]{0}', space=vmem, size = 0x1000, scoped, tag = 'output window, operand 2, single buffered']
    %15 = vsyncpa [#allocation3], 0
    %16 = vsyncpa [#allocation6], 0
    %17 = vsyncpa [#allocation9], 0
    %18 = vsyncpa [#allocation4], 0
    %19 = vsyncpa [#allocation12], 0
    // Predicated region
    $region2: #{tpu_custom_call.1} parent=1 // pred_check
      _
    $region3: #{tpu_custom_call.1} parent=1 // pred_check_branch
      %21 = sbr.rel (0) target = $region5
    $region4: #{tpu_custom_call.1} parent=1 // pred_region
      %s23 = ssub.s32 512, 512
      %24 = vsyncadd [#allocation3], %s23
      %s26 = sshll.u32 [#allocation2], 4
      %s27 = int_to_ptr.vmem [resolvable:$true] %s26
      %29 = dma.hbm_to_vmem [thread:$0]  %s0, 512, %s27, [#allocation3]
    $region5: #{tpu_custom_call.1} parent=1 // pred_fallthru
      _
    // Predicated region
    $region6: #{tpu_custom_call.1} parent=1 // pred_check
      _
    $region7: #{tpu_custom_call.1} parent=1 // pred_check_branch
      %31 = sbr.rel (0) target = $region9
    $region8: #{tpu_custom_call.1} parent=1 // pred_region
      %s33 = ssub.s32 8192, 8192
      %34 = vsyncadd [#allocation6], %s33
      %s35 = sshll.u32 [#allocation5], 4
      %s36 = int_to_ptr.vmem [resolvable:$true] %s35
      %41 = dma.hbm_to_vmem [thread:$0]  %s1, 8192, %s36, [#allocation6], 64, 64, 4
    $region9: #{tpu_custom_call.1} parent=1 // pred_fallthru
      _
    // Predicated region
    $region10: #{tpu_custom_call.1} parent=1 // pred_check
      _
    $region11: #{tpu_custom_call.1} parent=1 // pred_check_branch
      %43 = sbr.rel (0) target = $region13
    $region12: #{tpu_custom_call.1} parent=1 // pred_region
      _
    $region13: #{tpu_custom_call.1} parent=1 // pred_fallthru
      _
    // Predicated region
    $region14: #{tpu_custom_call.1} parent=1 // pred_check
      _
    $region15: #{tpu_custom_call.1} parent=1 // pred_check_branch
      %45 = sbr.rel (0) target = $region17
    $region16: #{tpu_custom_call.1} parent=1 // pred_region
      %s47 = ssub.s32 1024, 1024
      %48 = vsyncadd [#allocation6], %s47
      %s49 = sshll.u32 [#allocation7], 4
      %s50 = int_to_ptr.vmem [resolvable:$true] %s49
      %55 = dma.hbm_to_vmem [thread:$0]  %s3, 1024, %s50, [#allocation6], 64, 64, 4
    $region17: #{tpu_custom_call.1} parent=1 // pred_fallthru
      _
    // Predicated region
    $region18: #{tpu_custom_call.1} parent=1 // pred_check
      _
    $region19: #{tpu_custom_call.1} parent=1 // pred_check_branch
      %57 = sbr.rel (0) target = $region21
    $region20: #{tpu_custom_call.1} parent=1 // pred_region
      _
    $region21: #{tpu_custom_call.1} parent=1 // pred_fallthru
      _
    // Predicated region
    $region22: #{tpu_custom_call.1} parent=1 // pred_check
      _
    $region23: #{tpu_custom_call.1} parent=1 // pred_check_branch
      %59 = sbr.rel (0) target = $region25
    $region24: #{tpu_custom_call.1} parent=1 // pred_region
      %s61 = ssub.s32 1024, 1024
      %62 = vsyncadd [#allocation9], %s61
      %s63 = sshll.u32 [#allocation8], 4
      %s64 = int_to_ptr.vmem [resolvable:$true] %s63
      %69 = dma.hbm_to_vmem [thread:$0]  %s5, 1024, %s64, [#allocation9], 64, 64, 4
    $region25: #{tpu_custom_call.1} parent=1 // pred_fallthru
      _
    // Predicated region
    $region26: #{tpu_custom_call.1} parent=1 // pred_check
      _
    $region27: #{tpu_custom_call.1} parent=1 // pred_check_branch
      %71 = sbr.rel (0) target = $region29
    $region28: #{tpu_custom_call.1} parent=1 // pred_region
      _
    $region29: #{tpu_custom_call.1} parent=1 // pred_fallthru
      _
    // Predicated region
    $region30: #{tpu_custom_call.1} parent=1 // pred_check
      _
    $region31: #{tpu_custom_call.1} parent=1 // pred_check_branch
      %73 = sbr.rel (0) target = $region33
    $region32: #{tpu_custom_call.1} parent=1 // pred_region
      %74 = dma.done [#allocation3], 512
    $region33: #{tpu_custom_call.1} parent=1 // pred_fallthru
      _
    // Predicated region
    $region34: #{tpu_custom_call.1} parent=1 // pred_check
      _
    $region35: #{tpu_custom_call.1} parent=1 // pred_check_branch
      %76 = sbr.rel (0) target = $region37
    $region36: #{tpu_custom_call.1} parent=1 // pred_region
      %77 = dma.done [#allocation6], 8192
    $region37: #{tpu_custom_call.1} parent=1 // pred_fallthru
      _
    // Predicated region
    $region38: #{tpu_custom_call.1} parent=1 // pred_check
      _
    $region39: #{tpu_custom_call.1} parent=1 // pred_check_branch
      %79 = sbr.rel (0) target = $region41
    $region40: #{tpu_custom_call.1} parent=1 // pred_region
      %80 = dma.done [#allocation6], 1024
    $region41: #{tpu_custom_call.1} parent=1 // pred_fallthru
      _
    // Predicated region
    $region42: #{tpu_custom_call.1} parent=1 // pred_check
      _
    $region43: #{tpu_custom_call.1} parent=1 // pred_check_branch
      %82 = sbr.rel (0) target = $region45
    $region44: #{tpu_custom_call.1} parent=1 // pred_region
      %83 = dma.done [#allocation9], 1024
    $region45: #{tpu_custom_call.1} parent=1 // pred_fallthru
      _
    %v85 = vld [vmem:[#allocation2] sm:$0xff]
    %v86 = vld [vmem:[#allocation2 + $0x8] sm:$0xff]
    %v87 = vld [vmem:[#allocation2 + $0x10] sm:$0xff]
    %v88 = vld [vmem:[#allocation2 + $0x18] sm:$0xff]
    %v89 = vld [vmem:[#allocation5] sm:$0xf]
    %v90 = vld [vmem:[#allocation5 + $0x4] sm:$0xf]
    %v91 = vld [vmem:[#allocation5 + $0x8] sm:$0xf]
    %v92 = vld [vmem:[#allocation5 + $0xc] sm:$0xf]
    %v93 = vld [vmem:[#allocation5 + $0x10] sm:$0xf]
    %v94 = vld [vmem:[#allocation5 + $0x14] sm:$0xf]
    %v95 = vld [vmem:[#allocation5 + $0x18] sm:$0xf]
    %v96 = vld [vmem:[#allocation5 + $0x1c] sm:$0xf]
    %v97 = vld [vmem:[#allocation5 + $0x20] sm:$0xf]
    %v98 = vld [vmem:[#allocation5 + $0x24] sm:$0xf]
    %v99 = vld [vmem:[#allocation5 + $0x28] sm:$0xf]
    %v100 = vld [vmem:[#allocation5 + $0x2c] sm:$0xf]
    %v101 = vld [vmem:[#allocation5 + $0x30] sm:$0xf]
    %v102 = vld [vmem:[#allocation5 + $0x34] sm:$0xf]
    %v103 = vld [vmem:[#allocation5 + $0x38] sm:$0xf]
    %v104 = vld [vmem:[#allocation5 + $0x3c] sm:$0xf]
    %v105 = vld [vmem:[#allocation5 + $0x40] sm:$0xf]
    %v106 = vld [vmem:[#allocation5 + $0x44] sm:$0xf]
    %v107 = vld [vmem:[#allocation5 + $0x48] sm:$0xf]
    %v108 = vld [vmem:[#allocation5 + $0x4c] sm:$0xf]
    %v109 = vld [vmem:[#allocation5 + $0x50] sm:$0xf]
    %v110 = vld [vmem:[#allocation5 + $0x54] sm:$0xf]
    %v111 = vld [vmem:[#allocation5 + $0x58] sm:$0xf]
    %v112 = vld [vmem:[#allocation5 + $0x5c] sm:$0xf]
    %v113 = vld [vmem:[#allocation5 + $0x60] sm:$0xf]
    %v114 = vld [vmem:[#allocation5 + $0x64] sm:$0xf]
    %v115 = vld [vmem:[#allocation5 + $0x68] sm:$0xf]
    %v116 = vld [vmem:[#allocation5 + $0x6c] sm:$0xf]
    %v117 = vld [vmem:[#allocation5 + $0x70] sm:$0xf]
    %v118 = vld [vmem:[#allocation5 + $0x74] sm:$0xf]
    %v119 = vld [vmem:[#allocation5 + $0x78] sm:$0xf]
    %v120 = vld [vmem:[#allocation5 + $0x7c] sm:$0xf]
    %v121 = vld [vmem:[#allocation5 + $0x80] sm:$0xf]
    %v122 = vld [vmem:[#allocation5 + $0x84] sm:$0xf]
    %v123 = vld [vmem:[#allocation5 + $0x88] sm:$0xf]
    %v124 = vld [vmem:[#allocation5 + $0x8c] sm:$0xf]
    %v125 = vld [vmem:[#allocation5 + $0x90] sm:$0xf]
    %v126 = vld [vmem:[#allocation5 + $0x94] sm:$0xf]
    %v127 = vld [vmem:[#allocation5 + $0x98] sm:$0xf]
    %v128 = vld [vmem:[#allocation5 + $0x9c] sm:$0xf]
    %v129 = vld [vmem:[#allocation5 + $0xa0] sm:$0xf]
    %v130 = vld [vmem:[#allocation5 + $0xa4] sm:$0xf]
    %v131 = vld [vmem:[#allocation5 + $0xa8] sm:$0xf]
    %v132 = vld [vmem:[#allocation5 + $0xac] sm:$0xf]
    %v133 = vld [vmem:[#allocation5 + $0xb0] sm:$0xf]
    %v134 = vld [vmem:[#allocation5 + $0xb4] sm:$0xf]
    %v135 = vld [vmem:[#allocation5 + $0xb8] sm:$0xf]
    %v136 = vld [vmem:[#allocation5 + $0xbc] sm:$0xf]
    %v137 = vld [vmem:[#allocation5 + $0xc0] sm:$0xf]
    %v138 = vld [vmem:[#allocation5 + $0xc4] sm:$0xf]
    %v139 = vld [vmem:[#allocation5 + $0xc8] sm:$0xf]
    %v140 = vld [vmem:[#allocation5 + $0xcc] sm:$0xf]
    %v141 = vld [vmem:[#allocation5 + $0xd0] sm:$0xf]
    %v142 = vld [vmem:[#allocation5 + $0xd4] sm:$0xf]
    %v143 = vld [vmem:[#allocation5 + $0xd8] sm:$0xf]
    %v144 = vld [vmem:[#allocation5 + $0xdc] sm:$0xf]
    %v145 = vld [vmem:[#allocation5 + $0xe0] sm:$0xf]
    %v146 = vld [vmem:[#allocation5 + $0xe4] sm:$0xf]
    %v147 = vld [vmem:[#allocation5 + $0xe8] sm:$0xf]
    %v148 = vld [vmem:[#allocation5 + $0xec] sm:$0xf]
    %v149 = vld [vmem:[#allocation5 + $0xf0] sm:$0xf]
    %v150 = vld [vmem:[#allocation5 + $0xf4] sm:$0xf]
    %v151 = vld [vmem:[#allocation5 + $0xf8] sm:$0xf]
    %v152 = vld [vmem:[#allocation5 + $0xfc] sm:$0xf]
    %v153 = vld [vmem:[#allocation5 + $0x100] sm:$0xf]
    %v154 = vld [vmem:[#allocation5 + $0x104] sm:$0xf]
    %v155 = vld [vmem:[#allocation5 + $0x108] sm:$0xf]
    %v156 = vld [vmem:[#allocation5 + $0x10c] sm:$0xf]
    %v157 = vld [vmem:[#allocation5 + $0x110] sm:$0xf]
    %v158 = vld [vmem:[#allocation5 + $0x114] sm:$0xf]
    %v159 = vld [vmem:[#allocation5 + $0x118] sm:$0xf]
    %v160 = vld [vmem:[#allocation5 + $0x11c] sm:$0xf]
    %v161 = vld [vmem:[#allocation5 + $0x120] sm:$0xf]
    %v162 = vld [vmem:[#allocation5 + $0x124] sm:$0xf]
    %v163 = vld [vmem:[#allocation5 + $0x128] sm:$0xf]
    %v164 = vld [vmem:[#allocation5 + $0x12c] sm:$0xf]
    %v165 = vld [vmem:[#allocation5 + $0x130] sm:$0xf]
    %v166 = vld [vmem:[#allocation5 + $0x134] sm:$0xf]
    %v167 = vld [vmem:[#allocation5 + $0x138] sm:$0xf]
    %v168 = vld [vmem:[#allocation5 + $0x13c] sm:$0xf]
    %v169 = vld [vmem:[#allocation5 + $0x140] sm:$0xf]
    %v170 = vld [vmem:[#allocation5 + $0x144] sm:$0xf]
    %v171 = vld [vmem:[#allocation5 + $0x148] sm:$0xf]
    %v172 = vld [vmem:[#allocation5 + $0x14c] sm:$0xf]
    %v173 = vld [vmem:[#allocation5 + $0x150] sm:$0xf]
    %v174 = vld [vmem:[#allocation5 + $0x154] sm:$0xf]
    %v175 = vld [vmem:[#allocation5 + $0x158] sm:$0xf]
    %v176 = vld [vmem:[#allocation5 + $0x15c] sm:$0xf]
    %v177 = vld [vmem:[#allocation5 + $0x160] sm:$0xf]
    %v178 = vld [vmem:[#allocation5 + $0x164] sm:$0xf]
    %v179 = vld [vmem:[#allocation5 + $0x168] sm:$0xf]
    %v180 = vld [vmem:[#allocation5 + $0x16c] sm:$0xf]
    %v181 = vld [vmem:[#allocation5 + $0x170] sm:$0xf]
    %v182 = vld [vmem:[#allocation5 + $0x174] sm:$0xf]
    %v183 = vld [vmem:[#allocation5 + $0x178] sm:$0xf]
    %v184 = vld [vmem:[#allocation5 + $0x17c] sm:$0xf]
    %v185 = vld [vmem:[#allocation5 + $0x180] sm:$0xf]
    %v186 = vld [vmem:[#allocation5 + $0x184] sm:$0xf]
    %v187 = vld [vmem:[#allocation5 + $0x188] sm:$0xf]
    %v188 = vld [vmem:[#allocation5 + $0x18c] sm:$0xf]
    %v189 = vld [vmem:[#allocation5 + $0x190] sm:$0xf]
    %v190 = vld [vmem:[#allocation5 + $0x194] sm:$0xf]
    %v191 = vld [vmem:[#allocation5 + $0x198] sm:$0xf]
    %v192 = vld [vmem:[#allocation5 + $0x19c] sm:$0xf]
    %v193 = vld [vmem:[#allocation5 + $0x1a0] sm:$0xf]
    %v194 = vld [vmem:[#allocation5 + $0x1a4] sm:$0xf]
    %v195 = vld [vmem:[#allocation5 + $0x1a8] sm:$0xf]
    %v196 = vld [vmem:[#allocation5 + $0x1ac] sm:$0xf]
    %v197 = vld [vmem:[#allocation5 + $0x1b0] sm:$0xf]
    %v198 = vld [vmem:[#allocation5 + $0x1b4] sm:$0xf]
    %v199 = vld [vmem:[#allocation5 + $0x1b8] sm:$0xf]
    %v200 = vld [vmem:[#allocation5 + $0x1bc] sm:$0xf]
    %v201 = vld [vmem:[#allocation5 + $0x1c0] sm:$0xf]
    %v202 = vld [vmem:[#allocation5 + $0x1c4] sm:$0xf]
    %v203 = vld [vmem:[#allocation5 + $0x1c8] sm:$0xf]
    %v204 = vld [vmem:[#allocation5 + $0x1cc] sm:$0xf]
    %v205 = vld [vmem:[#allocation5 + $0x1d0] sm:$0xf]
    %v206 = vld [vmem:[#allocation5 + $0x1d4] sm:$0xf]
    %v207 = vld [vmem:[#allocation5 + $0x1d8] sm:$0xf]
    %v208 = vld [vmem:[#allocation5 + $0x1dc] sm:$0xf]
    %v209 = vld [vmem:[#allocation5 + $0x1e0] sm:$0xf]
    %v210 = vld [vmem:[#allocation5 + $0x1e4] sm:$0xf]
    %v211 = vld [vmem:[#allocation5 + $0x1e8] sm:$0xf]
    %v212 = vld [vmem:[#allocation5 + $0x1ec] sm:$0xf]
    %v213 = vld [vmem:[#allocation5 + $0x1f0] sm:$0xf]
    %v214 = vld [vmem:[#allocation5 + $0x1f4] sm:$0xf]
    %v215 = vld [vmem:[#allocation5 + $0x1f8] sm:$0xf]
    %v216 = vld [vmem:[#allocation5 + $0x1fc] sm:$0xf]
    %v217 = vld [vmem:[%s2] sm:$0x1]
    %v219 = vlaneseq
    %v220 = vshrl.u32 %v219, 7
    %v221 = vsub.s32 0, %v220
    %v222 = vrot.slane %v217, %v221
    %v228 = vunpack.c.l.b16 %v85
    %v229 = vunpack.c.h.b16 %v85
    %v230 = vunpack.c.l.b16 %v86
    %v231 = vunpack.c.h.b16 %v86
    %v232 = vunpack.c.l.b16 %v87
    %v233 = vunpack.c.h.b16 %v87
    %v234 = vunpack.c.l.b16 %v88
    %v235 = vunpack.c.h.b16 %v88
    %v236 = vpack.c.b16 %v228, %v228
    %v237 = vpack.c.b16 %v229, %v229
    %v238 = vpack.c.b16 %v230, %v230
    %v239 = vpack.c.b16 %v231, %v231
    %v240 = vpack.c.b16 %v232, %v232
    %v241 = vpack.c.b16 %v233, %v233
    %v242 = vpack.c.b16 %v234, %v234
    %v243 = vpack.c.b16 %v235, %v235
    %v380 = vunpack.c.l.b16 %v89
    %v381 = vunpack.c.l.b16 %v90
    %v382 = vunpack.c.l.b16 %v91
    %v383 = vunpack.c.l.b16 %v92
    %v384 = vunpack.c.l.b16 %v93
    %v385 = vunpack.c.l.b16 %v94
    %v386 = vunpack.c.l.b16 %v95
    %v387 = vunpack.c.l.b16 %v96
    %v388 = vunpack.c.l.b16 %v97
    %v389 = vunpack.c.l.b16 %v98
    %v390 = vunpack.c.l.b16 %v99
    %v391 = vunpack.c.l.b16 %v100
    %v392 = vunpack.c.l.b16 %v101
    %v393 = vunpack.c.l.b16 %v102
    %v394 = vunpack.c.l.b16 %v103
    %v395 = vunpack.c.l.b16 %v104
    %v396 = vunpack.c.l.b16 %v105
    %v397 = vunpack.c.l.b16 %v106
    %v398 = vunpack.c.l.b16 %v107
    %v399 = vunpack.c.l.b16 %v108
    %v400 = vunpack.c.l.b16 %v109
    %v401 = vunpack.c.l.b16 %v110
    %v402 = vunpack.c.l.b16 %v111
    %v403 = vunpack.c.l.b16 %v112
    %v404 = vunpack.c.l.b16 %v113
    %v405 = vunpack.c.l.b16 %v114
    %v406 = vunpack.c.l.b16 %v115
    %v407 = vunpack.c.l.b16 %v116
    %v408 = vunpack.c.l.b16 %v117
    %v409 = vunpack.c.l.b16 %v118
    %v410 = vunpack.c.l.b16 %v119
    %v411 = vunpack.c.l.b16 %v120
    %v412 = vunpack.c.l.b16 %v121
    %v413 = vunpack.c.l.b16 %v122
    %v414 = vunpack.c.l.b16 %v123
    %v415 = vunpack.c.l.b16 %v124
    %v416 = vunpack.c.l.b16 %v125
    %v417 = vunpack.c.l.b16 %v126
    %v418 = vunpack.c.l.b16 %v127
    %v419 = vunpack.c.l.b16 %v128
    %v420 = vunpack.c.l.b16 %v129
    %v421 = vunpack.c.l.b16 %v130
    %v422 = vunpack.c.l.b16 %v131
    %v423 = vunpack.c.l.b16 %v132
    %v424 = vunpack.c.l.b16 %v133
    %v425 = vunpack.c.l.b16 %v134
    %v426 = vunpack.c.l.b16 %v135
    %v427 = vunpack.c.l.b16 %v136
    %v428 = vunpack.c.l.b16 %v137
    %v429 = vunpack.c.l.b16 %v138
    %v430 = vunpack.c.l.b16 %v139
    %v431 = vunpack.c.l.b16 %v140
    %v432 = vunpack.c.l.b16 %v141
    %v433 = vunpack.c.l.b16 %v142
    %v434 = vunpack.c.l.b16 %v143
    %v435 = vunpack.c.l.b16 %v144
    %v436 = vunpack.c.l.b16 %v145
    %v437 = vunpack.c.l.b16 %v146
    %v438 = vunpack.c.l.b16 %v147
    %v439 = vunpack.c.l.b16 %v148
    %v440 = vunpack.c.l.b16 %v149
    %v441 = vunpack.c.l.b16 %v150
    %v442 = vunpack.c.l.b16 %v151
    %v443 = vunpack.c.l.b16 %v152
    %v444 = vunpack.c.l.b16 %v153
    %v445 = vunpack.c.l.b16 %v154
    %v446 = vunpack.c.l.b16 %v155
    %v447 = vunpack.c.l.b16 %v156
    %v448 = vunpack.c.l.b16 %v157
    %v449 = vunpack.c.l.b16 %v158
    %v450 = vunpack.c.l.b16 %v159
    %v451 = vunpack.c.l.b16 %v160
    %v452 = vunpack.c.l.b16 %v161
    %v453 = vunpack.c.l.b16 %v162
    %v454 = vunpack.c.l.b16 %v163
    %v455 = vunpack.c.l.b16 %v164
    %v456 = vunpack.c.l.b16 %v165
    %v457 = vunpack.c.l.b16 %v166
    %v458 = vunpack.c.l.b16 %v167
    %v459 = vunpack.c.l.b16 %v168
    %v460 = vunpack.c.l.b16 %v169
    %v461 = vunpack.c.l.b16 %v170
    %v462 = vunpack.c.l.b16 %v171
    %v463 = vunpack.c.l.b16 %v172
    %v464 = vunpack.c.l.b16 %v173
    %v465 = vunpack.c.l.b16 %v174
    %v466 = vunpack.c.l.b16 %v175
    %v467 = vunpack.c.l.b16 %v176
    %v468 = vunpack.c.l.b16 %v177
    %v469 = vunpack.c.l.b16 %v178
    %v470 = vunpack.c.l.b16 %v179
    %v471 = vunpack.c.l.b16 %v180
    %v472 = vunpack.c.l.b16 %v181
    %v473 = vunpack.c.l.b16 %v182
    %v474 = vunpack.c.l.b16 %v183
    %v475 = vunpack.c.l.b16 %v184
    %v476 = vunpack.c.l.b16 %v185
    %v477 = vunpack.c.l.b16 %v186
    %v478 = vunpack.c.l.b16 %v187
    %v479 = vunpack.c.l.b16 %v188
    %v480 = vunpack.c.l.b16 %v189
    %v481 = vunpack.c.l.b16 %v190
    %v482 = vunpack.c.l.b16 %v191
    %v483 = vunpack.c.l.b16 %v192
    %v484 = vunpack.c.l.b16 %v193
    %v485 = vunpack.c.l.b16 %v194
    %v486 = vunpack.c.l.b16 %v195
    %v487 = vunpack.c.l.b16 %v196
    %v488 = vunpack.c.l.b16 %v197
    %v489 = vunpack.c.l.b16 %v198
    %v490 = vunpack.c.l.b16 %v199
    %v491 = vunpack.c.l.b16 %v200
    %v492 = vunpack.c.l.b16 %v201
    %v493 = vunpack.c.l.b16 %v202
    %v494 = vunpack.c.l.b16 %v203
    %v495 = vunpack.c.l.b16 %v204
    %v496 = vunpack.c.l.b16 %v205
    %v497 = vunpack.c.l.b16 %v206
    %v498 = vunpack.c.l.b16 %v207
    %v499 = vunpack.c.l.b16 %v208
    %v500 = vunpack.c.l.b16 %v209
    %v501 = vunpack.c.l.b16 %v210
    %v502 = vunpack.c.l.b16 %v211
    %v503 = vunpack.c.l.b16 %v212
    %v504 = vunpack.c.l.b16 %v213
    %v505 = vunpack.c.l.b16 %v214
    %v506 = vunpack.c.l.b16 %v215
    %v507 = vunpack.c.l.b16 %v216
    %v508 = vpack.c.b16 %v381, %v380
    %v509 = vpack.c.b16 %v383, %v382
    %v510 = vpack.c.b16 %v385, %v384
    %v511 = vpack.c.b16 %v387, %v386
    %v512 = vpack.c.b16 %v389, %v388
    %v513 = vpack.c.b16 %v391, %v390
    %v514 = vpack.c.b16 %v393, %v392
    %v515 = vpack.c.b16 %v395, %v394
    %v516 = vpack.c.b16 %v397, %v396
    %v517 = vpack.c.b16 %v399, %v398
    %v518 = vpack.c.b16 %v401, %v400
    %v519 = vpack.c.b16 %v403, %v402
    %v520 = vpack.c.b16 %v405, %v404
    %v521 = vpack.c.b16 %v407, %v406
    %v522 = vpack.c.b16 %v409, %v408
    %v523 = vpack.c.b16 %v411, %v410
    %v524 = vpack.c.b16 %v413, %v412
    %v525 = vpack.c.b16 %v415, %v414
    %v526 = vpack.c.b16 %v417, %v416
    %v527 = vpack.c.b16 %v419, %v418
    %v528 = vpack.c.b16 %v421, %v420
    %v529 = vpack.c.b16 %v423, %v422
    %v530 = vpack.c.b16 %v425, %v424
    %v531 = vpack.c.b16 %v427, %v426
    %v532 = vpack.c.b16 %v429, %v428
    %v533 = vpack.c.b16 %v431, %v430
    %v534 = vpack.c.b16 %v433, %v432
    %v535 = vpack.c.b16 %v435, %v434
    %v536 = vpack.c.b16 %v437, %v436
    %v537 = vpack.c.b16 %v439, %v438
    %v538 = vpack.c.b16 %v441, %v440
    %v539 = vpack.c.b16 %v443, %v442
    %v540 = vpack.c.b16 %v445, %v444
    %v541 = vpack.c.b16 %v447, %v446
    %v542 = vpack.c.b16 %v449, %v448
    %v543 = vpack.c.b16 %v451, %v450
    %v544 = vpack.c.b16 %v453, %v452
    %v545 = vpack.c.b16 %v455, %v454
    %v546 = vpack.c.b16 %v457, %v456
    %v547 = vpack.c.b16 %v459, %v458
    %v548 = vpack.c.b16 %v461, %v460
    %v549 = vpack.c.b16 %v463, %v462
    %v550 = vpack.c.b16 %v465, %v464
    %v551 = vpack.c.b16 %v467, %v466
    %v552 = vpack.c.b16 %v469, %v468
    %v553 = vpack.c.b16 %v471, %v470
    %v554 = vpack.c.b16 %v473, %v472
    %v555 = vpack.c.b16 %v475, %v474
    %v556 = vpack.c.b16 %v477, %v476
    %v557 = vpack.c.b16 %v479, %v478
    %v558 = vpack.c.b16 %v481, %v480
    %v559 = vpack.c.b16 %v483, %v482
    %v560 = vpack.c.b16 %v485, %v484
    %v561 = vpack.c.b16 %v487, %v486
    %v562 = vpack.c.b16 %v489, %v488
    %v563 = vpack.c.b16 %v491, %v490
    %v564 = vpack.c.b16 %v493, %v492
    %v565 = vpack.c.b16 %v495, %v494
    %v566 = vpack.c.b16 %v497, %v496
    %v567 = vpack.c.b16 %v499, %v498
    %v568 = vpack.c.b16 %v501, %v500
    %v569 = vpack.c.b16 %v503, %v502
    %v570 = vpack.c.b16 %v505, %v504
    %v571 = vpack.c.b16 %v507, %v506
    %636 = vmatprep.subr.bf16.mxu0 0
    %637 = vmatpush1.bf16.msra.mxu0 %v508
    %638 = vmatprep.subr.bf16.mxu0 0
    %639 = vmatpush1.bf16.msra.mxu0 %v509
    %640 = vmatprep.subr.bf16.mxu0 0
    %641 = vmatpush1.bf16.msra.mxu0 %v510
    %642 = vmatprep.subr.bf16.mxu0 0
    %643 = vmatpush1.bf16.msra.mxu0 %v511
    %644 = vmatprep.subr.bf16.mxu0 0
    %645 = vmatpush1.bf16.msra.mxu0 %v512
    %646 = vmatprep.subr.bf16.mxu0 0
    %647 = vmatpush1.bf16.msra.mxu0 %v513
    %648 = vmatprep.subr.bf16.mxu0 0
    %649 = vmatpush1.bf16.msra.mxu0 %v514
    %650 = vmatprep.subr.bf16.mxu0 0
    %651 = vmatpush1.bf16.msra.mxu0 %v515
    %652 = vmatprep.subr.bf16.mxu0 0
    %653 = vmatpush1.bf16.msra.mxu0 %v516
    %654 = vmatprep.subr.bf16.mxu0 0
    %655 = vmatpush1.bf16.msra.mxu0 %v517
    %656 = vmatprep.subr.bf16.mxu0 0
    %657 = vmatpush1.bf16.msra.mxu0 %v518
    %658 = vmatprep.subr.bf16.mxu0 0
    %659 = vmatpush1.bf16.msra.mxu0 %v519
    %660 = vmatprep.subr.bf16.mxu0 0
    %661 = vmatpush1.bf16.msra.mxu0 %v520
    %662 = vmatprep.subr.bf16.mxu0 0
    %663 = vmatpush1.bf16.msra.mxu0 %v521
    %664 = vmatprep.subr.bf16.mxu0 0
    %665 = vmatpush1.bf16.msra.mxu0 %v522
    %666 = vmatprep.subr.bf16.mxu0 0
    %667 = vmatpush1.bf16.msra.mxu0 %v523
    %668 = vmatprep.mubr.bf16.mxu0 %v237
    %669 = vmatmul.mubr.bf16.gmra.mrb[0].mxu0 %v236
    %v670 = vpop.f32.mrb[0].mxu0
    %v671 = vadd.f32 %v222, %v670
    %v672 = vpop.f32.mrb[0].mxu0
    %v673 = vpop.f32.mrb[0].mxu0
    %v674 = vpop.f32.mrb[0].mxu0
    %675 = vdwg.mxu0
    %676 = vmatprep.subr.bf16.mxu0 0
    %677 = vmatpush1.bf16.msra.mxu0 %v524
    %678 = vmatprep.subr.bf16.mxu0 0
    %679 = vmatpush1.bf16.msra.mxu0 %v525
    %680 = vmatprep.subr.bf16.mxu0 0
    %681 = vmatpush1.bf16.msra.mxu0 %v526
    %682 = vmatprep.subr.bf16.mxu0 0
    %683 = vmatpush1.bf16.msra.mxu0 %v527
    %684 = vmatprep.subr.bf16.mxu0 0
    %685 = vmatpush1.bf16.msra.mxu0 %v528
    %686 = vmatprep.subr.bf16.mxu0 0
    %687 = vmatpush1.bf16.msra.mxu0 %v529
    %688 = vmatprep.subr.bf16.mxu0 0
    %689 = vmatpush1.bf16.msra.mxu0 %v530
    %690 = vmatprep.subr.bf16.mxu0 0
    %691 = vmatpush1.bf16.msra.mxu0 %v531
    %692 = vmatprep.subr.bf16.mxu0 0
    %693 = vmatpush1.bf16.msra.mxu0 %v532
    %694 = vmatprep.subr.bf16.mxu0 0
    %695 = vmatpush1.bf16.msra.mxu0 %v533
    %696 = vmatprep.subr.bf16.mxu0 0
    %697 = vmatpush1.bf16.msra.mxu0 %v534
    %698 = vmatprep.subr.bf16.mxu0 0
    %699 = vmatpush1.bf16.msra.mxu0 %v535
    %700 = vmatprep.subr.bf16.mxu0 0
    %701 = vmatpush1.bf16.msra.mxu0 %v536
    %702 = vmatprep.subr.bf16.mxu0 0
    %703 = vmatpush1.bf16.msra.mxu0 %v537
    %704 = vmatprep.subr.bf16.mxu0 0
    %705 = vmatpush1.bf16.msra.mxu0 %v538
    %706 = vmatprep.subr.bf16.mxu0 0
    %707 = vmatpush1.bf16.msra.mxu0 %v539
    %708 = vmatprep.mubr.bf16.mxu0 %v239
    %709 = vmatmul.mubr.bf16.gmra.mrb[0].mxu0 %v238
    %v710 = vpop.f32.mrb[0].mxu0
    %v711 = vadd.f32 %v671, %v710
    %v712 = vpop.f32.mrb[0].mxu0
    %v713 = vpop.f32.mrb[0].mxu0
    %v714 = vpop.f32.mrb[0].mxu0
    %715 = vdwg.mxu0
    %716 = vmatprep.subr.bf16.mxu0 0
    %717 = vmatpush1.bf16.msra.mxu0 %v540
    %718 = vmatprep.subr.bf16.mxu0 0
    %719 = vmatpush1.bf16.msra.mxu0 %v541
    %720 = vmatprep.subr.bf16.mxu0 0
    %721 = vmatpush1.bf16.msra.mxu0 %v542
    %722 = vmatprep.subr.bf16.mxu0 0
    %723 = vmatpush1.bf16.msra.mxu0 %v543
    %724 = vmatprep.subr.bf16.mxu0 0
    %725 = vmatpush1.bf16.msra.mxu0 %v544
    %726 = vmatprep.subr.bf16.mxu0 0
    %727 = vmatpush1.bf16.msra.mxu0 %v545
    %728 = vmatprep.subr.bf16.mxu0 0
    %729 = vmatpush1.bf16.msra.mxu0 %v546
    %730 = vmatprep.subr.bf16.mxu0 0
    %731 = vmatpush1.bf16.msra.mxu0 %v547
    %732 = vmatprep.subr.bf16.mxu0 0
    %733 = vmatpush1.bf16.msra.mxu0 %v548
    %734 = vmatprep.subr.bf16.mxu0 0
    %735 = vmatpush1.bf16.msra.mxu0 %v549
    %736 = vmatprep.subr.bf16.mxu0 0
    %737 = vmatpush1.bf16.msra.mxu0 %v550
    %738 = vmatprep.subr.bf16.mxu0 0
    %739 = vmatpush1.bf16.msra.mxu0 %v551
    %740 = vmatprep.subr.bf16.mxu0 0
    %741 = vmatpush1.bf16.msra.mxu0 %v552
    %742 = vmatprep.subr.bf16.mxu0 0
    %743 = vmatpush1.bf16.msra.mxu0 %v553
    %744 = vmatprep.subr.bf16.mxu0 0
    %745 = vmatpush1.bf16.msra.mxu0 %v554
    %746 = vmatprep.subr.bf16.mxu0 0
    %747 = vmatpush1.bf16.msra.mxu0 %v555
    %748 = vmatprep.mubr.bf16.mxu0 %v241
    %749 = vmatmul.mubr.bf16.gmra.mrb[0].mxu0 %v240
    %v750 = vpop.f32.mrb[0].mxu0
    %v751 = vadd.f32 %v711, %v750
    %v752 = vpop.f32.mrb[0].mxu0
    %v753 = vpop.f32.mrb[0].mxu0
    %v754 = vpop.f32.mrb[0].mxu0
    %755 = vdwg.mxu0
    %756 = vmatprep.subr.bf16.mxu0 0
    %757 = vmatpush1.bf16.msra.mxu0 %v556
    %758 = vmatprep.subr.bf16.mxu0 0
    %759 = vmatpush1.bf16.msra.mxu0 %v557
    %760 = vmatprep.subr.bf16.mxu0 0
    %761 = vmatpush1.bf16.msra.mxu0 %v558
    %762 = vmatprep.subr.bf16.mxu0 0
    %763 = vmatpush1.bf16.msra.mxu0 %v559
    %764 = vmatprep.subr.bf16.mxu0 0
    %765 = vmatpush1.bf16.msra.mxu0 %v560
    %766 = vmatprep.subr.bf16.mxu0 0
    %767 = vmatpush1.bf16.msra.mxu0 %v561
    %768 = vmatprep.subr.bf16.mxu0 0
    %769 = vmatpush1.bf16.msra.mxu0 %v562
    %770 = vmatprep.subr.bf16.mxu0 0
    %771 = vmatpush1.bf16.msra.mxu0 %v563
    %772 = vmatprep.subr.bf16.mxu0 0
    %773 = vmatpush1.bf16.msra.mxu0 %v564
    %774 = vmatprep.subr.bf16.mxu0 0
    %775 = vmatpush1.bf16.msra.mxu0 %v565
    %776 = vmatprep.subr.bf16.mxu0 0
    %777 = vmatpush1.bf16.msra.mxu0 %v566
    %778 = vmatprep.subr.bf16.mxu0 0
    %779 = vmatpush1.bf16.msra.mxu0 %v567
    %780 = vmatprep.subr.bf16.mxu0 0
    %781 = vmatpush1.bf16.msra.mxu0 %v568
    %782 = vmatprep.subr.bf16.mxu0 0
    %783 = vmatpush1.bf16.msra.mxu0 %v569
    %784 = vmatprep.subr.bf16.mxu0 0
    %785 = vmatpush1.bf16.msra.mxu0 %v570
    %786 = vmatprep.subr.bf16.mxu0 0
    %787 = vmatpush1.bf16.msra.mxu0 %v571
    %788 = vmatprep.mubr.bf16.mxu0 %v243
    %789 = vmatmul.mubr.bf16.gmra.mrb[0].mxu0 %v242
    %v790 = vpop.f32.mrb[0].mxu0
    %v791 = vadd.f32 %v751, %v790
    %v792 = vpop.f32.mrb[0].mxu0
    %v793 = vpop.f32.mrb[0].mxu0
    %v794 = vpop.f32.mrb[0].mxu0
    %795 = vdwg.mxu0
    %v796 = vmax.f32 %v791, 0.0
    %797 = vst [vmem:[#allocation11] sm:$0xff] %v796
    %v798 = vpack.c.bf16 %v796, %v796
    %v799 = vld [vmem:[#allocation7] sm:$0xf]
    %v800 = vld [vmem:[#allocation7 + $0x4] sm:$0xf]
    %v801 = vld [vmem:[#allocation7 + $0x8] sm:$0xf]
    %v802 = vld [vmem:[#allocation7 + $0xc] sm:$0xf]
    %v803 = vld [vmem:[#allocation7 + $0x10] sm:$0xf]
    %v804 = vld [vmem:[#allocation7 + $0x14] sm:$0xf]
    %v805 = vld [vmem:[#allocation7 + $0x18] sm:$0xf]
    %v806 = vld [vmem:[#allocation7 + $0x1c] sm:$0xf]
    %v807 = vld [vmem:[#allocation7 + $0x20] sm:$0xf]
    %v808 = vld [vmem:[#allocation7 + $0x24] sm:$0xf]
    %v809 = vld [vmem:[#allocation7 + $0x28] sm:$0xf]
    %v810 = vld [vmem:[#allocation7 + $0x2c] sm:$0xf]
    %v811 = vld [vmem:[#allocation7 + $0x30] sm:$0xf]
    %v812 = vld [vmem:[#allocation7 + $0x34] sm:$0xf]
    %v813 = vld [vmem:[#allocation7 + $0x38] sm:$0xf]
    %v814 = vld [vmem:[#allocation7 + $0x3c] sm:$0xf]
    %v815 = vld [vmem:[%s4] sm:$0x1]
    %v817 = vlaneseq
    %v818 = vshrl.u32 %v817, 7
    %v819 = vsub.s32 0, %v818
    %v820 = vrot.slane %v815, %v819
    %v838 = vunpack.c.l.b16 %v799
    %v839 = vunpack.c.l.b16 %v800
    %v840 = vunpack.c.l.b16 %v801
    %v841 = vunpack.c.l.b16 %v802
    %v842 = vunpack.c.l.b16 %v803
    %v843 = vunpack.c.l.b16 %v804
    %v844 = vunpack.c.l.b16 %v805
    %v845 = vunpack.c.l.b16 %v806
    %v846 = vunpack.c.l.b16 %v807
    %v847 = vunpack.c.l.b16 %v808
    %v848 = vunpack.c.l.b16 %v809
    %v849 = vunpack.c.l.b16 %v810
    %v850 = vunpack.c.l.b16 %v811
    %v851 = vunpack.c.l.b16 %v812
    %v852 = vunpack.c.l.b16 %v813
    %v853 = vunpack.c.l.b16 %v814
    %v854 = vpack.c.b16 %v839, %v838
    %v855 = vpack.c.b16 %v841, %v840
    %v856 = vpack.c.b16 %v843, %v842
    %v857 = vpack.c.b16 %v845, %v844
    %v858 = vpack.c.b16 %v847, %v846
    %v859 = vpack.c.b16 %v849, %v848
    %v860 = vpack.c.b16 %v851, %v850
    %v861 = vpack.c.b16 %v853, %v852
    %870 = vmatprep.subr.bf16.mxu0 0
    %871 = vmatpush1.bf16.msra.mxu0 %v854
    %872 = vmatprep.subr.bf16.mxu0 0
    %873 = vmatpush1.bf16.msra.mxu0 %v855
    %874 = vmatprep.subr.bf16.mxu0 0
    %875 = vmatpush1.bf16.msra.mxu0 %v856
    %876 = vmatprep.subr.bf16.mxu0 0
    %877 = vmatpush1.bf16.msra.mxu0 %v857
    %878 = vmatprep.subr.bf16.mxu0 0
    %879 = vmatpush1.bf16.msra.mxu0 %v858
    %880 = vmatprep.subr.bf16.mxu0 0
    %881 = vmatpush1.bf16.msra.mxu0 %v859
    %882 = vmatprep.subr.bf16.mxu0 0
    %883 = vmatpush1.bf16.msra.mxu0 %v860
    %884 = vmatprep.subr.bf16.mxu0 0
    %885 = vmatpush1.bf16.msra.mxu0 %v861
    %886 = vmatprep.subr.bf16.mxu0 0
    %887 = vmatpush1.bf16.msra.mxu0 0
    %888 = vmatprep.subr.bf16.mxu0 0
    %889 = vmatpush1.bf16.msra.mxu0 0
    %890 = vmatprep.subr.bf16.mxu0 0
    %891 = vmatpush1.bf16.msra.mxu0 0
    %892 = vmatprep.subr.bf16.mxu0 0
    %893 = vmatpush1.bf16.msra.mxu0 0
    %894 = vmatprep.subr.bf16.mxu0 0
    %895 = vmatpush1.bf16.msra.mxu0 0
    %896 = vmatprep.subr.bf16.mxu0 0
    %897 = vmatpush1.bf16.msra.mxu0 0
    %898 = vmatprep.subr.bf16.mxu0 0
    %899 = vmatpush1.bf16.msra.mxu0 0
    %900 = vmatprep.subr.bf16.mxu0 0
    %901 = vmatpush1.bf16.msra.mxu0 0
    %902 = vmatprep.mubr.bf16.mxu0 0
    %903 = vmatmul.mubr.bf16.gmra.mrb[0].mxu0 %v798
    %v904 = vpop.f32.mrb[0].mxu0
    %v905 = vadd.f32 %v820, %v904
    %v906 = vpop.f32.mrb[0].mxu0
    %v907 = vpop.f32.mrb[0].mxu0
    %v908 = vpop.f32.mrb[0].mxu0
    %909 = vdwg.mxu0
    %v910 = vmax.f32 %v905, 0.0
    %911 = vst [vmem:[#allocation13] sm:$0xff] %v910
    %v912 = vpack.c.bf16 %v910, %v910
    %v913 = vld [vmem:[#allocation8] sm:$0xf]
    %v914 = vld [vmem:[#allocation8 + $0x4] sm:$0xf]
    %v915 = vld [vmem:[#allocation8 + $0x8] sm:$0xf]
    %v916 = vld [vmem:[#allocation8 + $0xc] sm:$0xf]
    %v917 = vld [vmem:[#allocation8 + $0x10] sm:$0xf]
    %v918 = vld [vmem:[#allocation8 + $0x14] sm:$0xf]
    %v919 = vld [vmem:[#allocation8 + $0x18] sm:$0xf]
    %v920 = vld [vmem:[#allocation8 + $0x1c] sm:$0xf]
    %v921 = vld [vmem:[#allocation8 + $0x20] sm:$0xf]
    %v922 = vld [vmem:[#allocation8 + $0x24] sm:$0xf]
    %v923 = vld [vmem:[#allocation8 + $0x28] sm:$0xf]
    %v924 = vld [vmem:[#allocation8 + $0x2c] sm:$0xf]
    %v925 = vld [vmem:[#allocation8 + $0x30] sm:$0xf]
    %v926 = vld [vmem:[#allocation8 + $0x34] sm:$0xf]
    %v927 = vld [vmem:[#allocation8 + $0x38] sm:$0xf]
    %v928 = vld [vmem:[#allocation8 + $0x3c] sm:$0xf]
    %v929 = vld [vmem:[%s6] sm:$0x1]
    %v931 = vlaneseq
    %v932 = vshrl.u32 %v931, 7
    %v933 = vsub.s32 0, %v932
    %v934 = vrot.slane %v929, %v933
    %v952 = vunpack.c.l.b16 %v913
    %v953 = vunpack.c.l.b16 %v914
    %v954 = vunpack.c.l.b16 %v915
    %v955 = vunpack.c.l.b16 %v916
    %v956 = vunpack.c.l.b16 %v917
    %v957 = vunpack.c.l.b16 %v918
    %v958 = vunpack.c.l.b16 %v919
    %v959 = vunpack.c.l.b16 %v920
    %v960 = vunpack.c.l.b16 %v921
    %v961 = vunpack.c.l.b16 %v922
    %v962 = vunpack.c.l.b16 %v923
    %v963 = vunpack.c.l.b16 %v924
    %v964 = vunpack.c.l.b16 %v925
    %v965 = vunpack.c.l.b16 %v926
    %v966 = vunpack.c.l.b16 %v927
    %v967 = vunpack.c.l.b16 %v928
    %v968 = vpack.c.b16 %v953, %v952
    %v969 = vpack.c.b16 %v955, %v954
    %v970 = vpack.c.b16 %v957, %v956
    %v971 = vpack.c.b16 %v959, %v958
    %v972 = vpack.c.b16 %v961, %v960
    %v973 = vpack.c.b16 %v963, %v962
    %v974 = vpack.c.b16 %v965, %v964
    %v975 = vpack.c.b16 %v967, %v966
    %984 = vmatprep.subr.bf16.mxu0 0
    %985 = vmatpush1.bf16.msra.mxu0 %v968
    %986 = vmatprep.subr.bf16.mxu0 0
    %987 = vmatpush1.bf16.msra.mxu0 %v969
    %988 = vmatprep.subr.bf16.mxu0 0
    %989 = vmatpush1.bf16.msra.mxu0 %v970
    %990 = vmatprep.subr.bf16.mxu0 0
    %991 = vmatpush1.bf16.msra.mxu0 %v971
    %992 = vmatprep.subr.bf16.mxu0 0
    %993 = vmatpush1.bf16.msra.mxu0 %v972
    %994 = vmatprep.subr.bf16.mxu0 0
    %995 = vmatpush1.bf16.msra.mxu0 %v973
    %996 = vmatprep.subr.bf16.mxu0 0
    %997 = vmatpush1.bf16.msra.mxu0 %v974
    %998 = vmatprep.subr.bf16.mxu0 0
    %999 = vmatpush1.bf16.msra.mxu0 %v975
    %1000 = vmatprep.subr.bf16.mxu0 0
    %1001 = vmatpush1.bf16.msra.mxu0 0
    %1002 = vmatprep.subr.bf16.mxu0 0
    %1003 = vmatpush1.bf16.msra.mxu0 0
    %1004 = vmatprep.subr.bf16.mxu0 0
    %1005 = vmatpush1.bf16.msra.mxu0 0
    %1006 = vmatprep.subr.bf16.mxu0 0
    %1007 = vmatpush1.bf16.msra.mxu0 0
    %1008 = vmatprep.subr.bf16.mxu0 0
    %1009 = vmatpush1.bf16.msra.mxu0 0
    %1010 = vmatprep.subr.bf16.mxu0 0
    %1011 = vmatpush1.bf16.msra.mxu0 0
    %1012 = vmatprep.subr.bf16.mxu0 0
    %1013 = vmatpush1.bf16.msra.mxu0 0
    %1014 = vmatprep.subr.bf16.mxu0 0
    %1015 = vmatpush1.bf16.msra.mxu0 0
    %1016 = vmatprep.mubr.bf16.mxu0 0
    %1017 = vmatmul.mubr.bf16.gmra.mrb[0].mxu0 %v912
    %v1018 = vpop.f32.mrb[0].mxu0
    %v1019 = vadd.f32 %v934, %v1018
    %v1020 = vpop.f32.mrb[0].mxu0
    %v1021 = vpop.f32.mrb[0].mxu0
    %v1022 = vpop.f32.mrb[0].mxu0
    %1023 = vdwg.mxu0
    %1024 = vst [vmem:[#allocation10] sm:$0xff] %v1019
    // Predicated region
    $region46: #{tpu_custom_call.1} parent=1 // pred_check
      _
    $region47: #{tpu_custom_call.1} parent=1 // pred_check_branch
      %1026 = sbr.rel (0) target = $region49
    $region48: #{tpu_custom_call.1} parent=1 // pred_region
      %s1028 = ssub.s32 128, 128
      %1029 = vsyncadd [#allocation4], %s1028
      %s1031 = sshll.u32 [#allocation10], 4
      %s1032 = int_to_ptr.vmem [resolvable:$true] %s1031
      %1034 = dma.vmem_to_hbm [thread:$0]  %s1032, 128, %s7, [#allocation4]
    $region49: #{tpu_custom_call.1} parent=1 // pred_fallthru
      _
    // Predicated region
    $region50: #{tpu_custom_call.1} parent=1 // pred_check
      _
    $region51: #{tpu_custom_call.1} parent=1 // pred_check_branch
      %1036 = sbr.rel (0) target = $region53
    $region52: #{tpu_custom_call.1} parent=1 // pred_region
      %s1038 = ssub.s32 128, 128
      %1039 = vsyncadd [#allocation12], %s1038
      %s1041 = sshll.u32 [#allocation11], 4
      %s1042 = int_to_ptr.vmem [resolvable:$true] %s1041
      %1044 = dma.vmem_to_hbm [thread:$0]  %s1042, 128, %s8, [#allocation12]
    $region53: #{tpu_custom_call.1} parent=1 // pred_fallthru
      _
    // Predicated region
    $region54: #{tpu_custom_call.1} parent=1 // pred_check
      _
    $region55: #{tpu_custom_call.1} parent=1 // pred_check_branch
      %1046 = sbr.rel (0) target = $region57
    $region56: #{tpu_custom_call.1} parent=1 // pred_region
      %s1048 = ssub.s32 128, 128
      %1049 = vsyncadd [#allocation12], %s1048
      %s1051 = sshll.u32 [#allocation13], 4
      %s1052 = int_to_ptr.vmem [resolvable:$true] %s1051
      %1054 = dma.vmem_to_hbm [thread:$0]  %s1052, 128, %s9, [#allocation12]
    $region57: #{tpu_custom_call.1} parent=1 // pred_fallthru
      _
    // Predicated region
    $region58: #{tpu_custom_call.1} parent=1 // pred_check
      _
    $region59: #{tpu_custom_call.1} parent=1 // pred_check_branch
      %1056 = sbr.rel (0) target = $region61
    $region60: #{tpu_custom_call.1} parent=1 // pred_region
      %1057 = dma.done [#allocation4], 128
    $region61: #{tpu_custom_call.1} parent=1 // pred_fallthru
      _
    // Predicated region
    $region62: #{tpu_custom_call.1} parent=1 // pred_check
      _
    $region63: #{tpu_custom_call.1} parent=1 // pred_check_branch
      %1059 = sbr.rel (0) target = $region65
    $region64: #{tpu_custom_call.1} parent=1 // pred_region
      %1060 = dma.done [#allocation12], 128
    $region65: #{tpu_custom_call.1} parent=1 // pred_fallthru
      _
    // Predicated region
    $region66: #{tpu_custom_call.1} parent=1 // pred_check
      _
    $region67: #{tpu_custom_call.1} parent=1 // pred_check_branch
      %1062 = sbr.rel (0) target = $region69
    $region68: #{tpu_custom_call.1} parent=1 // pred_region
      %1063 = dma.done [#allocation12], 128
    $region69: #{tpu_custom_call.1} parent=1 // pred_fallthru
      _
    %1064 = vsyncpa [#allocation3], 1
    %1065 = vsyncpa [#allocation6], 1
    %1066 = vsyncpa [#allocation9], 1
    %1067 = vsyncpa [#allocation4], 1
    %1068 = vsyncpa [#allocation12], 1

</llo_original>
